<compile_context>
chip_gen: v7x
topology: tpu7x:2x2x1
jax: 0.10.0
libtpu: 0.0.40
codegen_flags: <defaults>
</compile_context>

<pallas_src>
import jax
import jax.numpy as jnp
from jax import lax
from jax.experimental import pallas as pl
from jax.experimental.pallas import tpu as pltpu


def _elu(x):
    # ELU(alpha=1): x if x > 0 else exp(x) - 1  (min() keeps the untaken branch finite)
    return jnp.where(x > 0.0, x, jnp.exp(jnp.minimum(x, 0.0)) - 1.0)


def _renorm(w, maxnorm):
    # torch.renorm(w, p=2, dim=0, maxnorm): rows with ||row|| > maxnorm are scaled by
    # maxnorm / (norm + 1e-7), matching torch's implementation.
    flat = w.reshape(w.shape[0], -1)
    n = jnp.sqrt(jnp.sum(flat * flat, axis=1))
    s = jnp.where(n > maxnorm, maxnorm / (n + 1e-7), 1.0)
    return w * s.reshape((-1,) + (1,) * (w.ndim - 1))


# ----------------------------------------------------------------------------- kernel
def _eegnet_kernel(x_ref, m12_ref, b2_ref, m3_ref, b3_ref, m4_ref, bfc_ref, out_ref):
    # Stage 1: temporal conv + BN1 + depthwise spatial conv + BN2  -> ELU
    a2 = jnp.dot(x_ref[...], m12_ref[...],
                 preferred_element_type=jnp.float32) + b2_ref[...]
    a2 = _elu(a2)
    # Stage 2: AvgPool(1,4) + depthwise temporal conv(1,16) + pointwise conv + BN3 -> ELU
    a3 = jnp.dot(a2, m3_ref[...],
                 preferred_element_type=jnp.float32) + b3_ref[...]
    a3 = _elu(a3)
    # Stage 3: AvgPool(1,8) + Flatten + Linear (max-norm constrained)
    out_ref[...] = jnp.dot(a3, m4_ref[...],
                           preferred_element_type=jnp.float32) + bfc_ref[...]


def eegnet_pallas(x_flat, folded, *, num_classes, batch_tile=None):
    m12, b2, m3, b3, m4, bfc = folded
    B, K1 = x_flat.shape
    if batch_tile is None:
        batch_tile = B if B <= 8 else 8
    assert B % batch_tile == 0, "batch must be divisible by the batch tile"
    grid = (B // batch_tile,)

    def full(arr):
        return pl.BlockSpec(arr.shape, lambda i: (0, 0))

    return pl.pallas_call(
        _eegnet_kernel,
        out_shape=jax.ShapeDtypeStruct((B, num_classes), jnp.float32),
        grid=grid,
        in_specs=[
            pl.BlockSpec((batch_tile, K1), lambda i: (i, 0)),   # x        (B, E*Tpad)
            full(m12),                                          # M12      (E*Tpad, C2*W1)
            full(b2),                                           # bias2    (1, C2*W1)
            full(m3),                                           # M3       (C2*W1, f2*W3a)
            full(b3),                                           # bias3    (1, f2*W3a)
            full(m4),                                           # M4       (f2*W3a, nc)
            full(bfc),                                          # bfc      (1, nc)
        ],
        out_specs=pl.BlockSpec((batch_tile, num_classes), lambda i: (i, 0)),
        compiler_params=pltpu.CompilerParams(dimension_semantics=("parallel",)),
    )(x_flat, m12, b2, m3, b3, m4, bfc)


# ------------------------------------------------------------------ host-side fold (exact)
def fold_eegnet_params(p, *, E, f1, d, f2, nc, ks1, Tpad, W1, W2, ks3, pad3, W3a, W3):
    C2 = f1 * d
    eps = 1e-3
    s1 = p['g1'] / jnp.sqrt(p['v1'] + eps); sh1 = p['be1'] - p['m1'] * s1
    s2 = p['g2'] / jnp.sqrt(p['v2'] + eps); sh2 = p['be2'] - p['m2'] * s2
    s3 = p['g3'] / jnp.sqrt(p['v3'] + eps); sh3 = p['be3'] - p['m3'] * s3

    w1r = _renorm(p['w1'], 1.0).reshape(f1, ks1)
    w2r = _renorm(p['w2'], 1.0).reshape(C2, E)
    w3r = _renorm(p['w3d'], 1.0).reshape(C2, ks3)
    wpr = _renorm(p['wp'], 1.0).reshape(f2, C2)
    wfcr = _renorm(p['wfc'], 0.25)                       # (nc, f2*W3)

    grp = jnp.arange(C2) // d                            # group of each depthwise channel

    # --- M12: x (E*Tpad) -> pre-ELU layer-2 activation (C2*W1) -----------------------
    s_idx = jnp.arange(Tpad)[:, None]
    t_idx = jnp.arange(W1)[None, :]
    tap1 = s_idx - t_idx                                 # conv1 tap connecting (s, t)
    ok1 = (tap1 >= 0) & (tap1 < ks1)
    w1eff = w1r * s1[:, None]                            # BN1 scale folded into conv1
    toep1 = jnp.where(ok1[None], w1eff[:, jnp.clip(tap1, 0, ks1 - 1)], 0.0)  # (f1,Tpad,W1)
    w2eff = w2r * s2[:, None]                            # BN2 scale folded into conv2
    m12 = w2eff[:, :, None, None] * toep1[grp][:, None, :, :]   # (C2, E, Tpad, W1)
    m12 = m12.transpose(1, 2, 0, 3).reshape(E * Tpad, C2 * W1)
    bias2 = s2 * (sh1[grp] * jnp.sum(w2r, axis=1)) + sh2        # (C2,)
    b2 = jnp.repeat(bias2, W1)[None, :]                         # (1, C2*W1)

    # --- M3: ELU(layer2) (C2*W1) -> pre-ELU layer-3 activation (f2*W3a) ---------------
    t = jnp.arange(W1)
    u = jnp.arange(W3a)
    j = t // 4                                           # AvgPool(1,4) bucket of column t
    tap3 = j[:, None] - u[None, :] + pad3                # depthwise tap connecting (t, u)
    ok3 = (tap3 >= 0) & (tap3 < ks3) & (t[:, None] < 4 * W2)
    pconv = jnp.where(ok3[None], w3r[:, jnp.clip(tap3, 0, ks3 - 1)], 0.0) * 0.25  # (C2,W1,W3a)
    wpeff = wpr * s3[:, None]                            # BN3 scale folded into pointwise conv
    m3 = wpeff[:, :, None, None] * pconv[None, :, :, :]  # (f2, C2, W1, W3a)
    m3 = m3.transpose(1, 2, 0, 3).reshape(C2 * W1, f2 * W3a)
    b3 = jnp.repeat(sh3, W3a)[None, :]                   # (1, f2*W3a)

    # --- M4: ELU(layer3) (f2*W3a) -> logits: AvgPool(1,8) + Flatten + Linear ----------
    m = u // 8
    okp = u < 8 * W3                                     # columns dropped by the pool
    wfc3 = wfcr.reshape(nc, f2, W3)
    m4 = jnp.where(okp[None, None, :],
                   wfc3[:, :, jnp.clip(m, 0, W3 - 1)], 0.0) * 0.125   # (nc, f2, W3a)
    m4 = m4.transpose(1, 2, 0).reshape(f2 * W3a, nc)
    bfc = p['bfc'].reshape(1, nc)

    return (m12.astype(jnp.float32), b2.astype(jnp.float32),
            m3.astype(jnp.float32), b3.astype(jnp.float32),
            m4.astype(jnp.float32), bfc.astype(jnp.float32))


# -------------------------------------------------------------------- plain-JAX reference
def _bn(h, g, b, m, v, eps=1e-3):
    shp = (1, -1, 1, 1)
    return (h - m.reshape(shp)) * (g / jnp.sqrt(v + eps)).reshape(shp) + b.reshape(shp)


def _avgpool_w(h, k):
    Wo = h.shape[-1] // k
    return h[..., :Wo * k].reshape(h.shape[:-1] + (Wo, k)).mean(-1)


def eegnet_reference(x, p, cfg):
    dn = ('NCHW', 'OIHW', 'NCHW')
    hp = lax.Precision.HIGHEST
    B = x.shape[0]
    h = x[:, None, :, :]
    h = lax.conv_general_dilated(h, _renorm(p['w1'], 1.0), (1, 1),
                                 ((0, 0), (cfg['pad1'], cfg['pad1'])),
                                 dimension_numbers=dn, precision=hp)
    h = _bn(h, p['g1'], p['be1'], p['m1'], p['v1'])
    h = lax.conv_general_dilated(h, _renorm(p['w2'], 1.0), (1, 1), ((0, 0), (0, 0)),
                                 dimension_numbers=dn, feature_group_count=cfg['f1'],
                                 precision=hp)
    h = _bn(h, p['g2'], p['be2'], p['m2'], p['v2'])
    h = _elu(h)
    h = _avgpool_w(h, 4)
    h = lax.conv_general_dilated(h, _renorm(p['w3d'], 1.0), (1, 1), ((0, 0), (8, 8)),
                                 dimension_numbers=dn,
                                 feature_group_count=cfg['f1'] * cfg['d'], precision=hp)
    h = lax.conv_general_dilated(h, _renorm(p['wp'], 1.0), (1, 1), ((0, 0), (0, 0)),
                                 dimension_numbers=dn, precision=hp)
    h = _bn(h, p['g3'], p['be3'], p['m3'], p['v3'])
    h = _elu(h)
    h = _avgpool_w(h, 8)
    flat = h.reshape(B, -1)
    wfc = _renorm(p['wfc'], 0.25)
    return jnp.dot(flat, wfc.T, precision=hp) + p['bfc']


# ----------------------------------------------------------------------------- main
if __name__ == "__main__":
    # module hyper-parameters (small but shape-consistent with the PyTorch __init__)
    f1, f2, d = 4, 8, 2
    E = 4                         # num_electrodes
    input_time_length = 4
    sampling_rate = 16
    num_classes = 2
    B = 2

    T = input_time_length * sampling_rate           # 64
    ks1 = sampling_rate // 2                        # 8
    pad1 = ks1 // 2                                 # 4
    Tpad = T + 2 * pad1                             # 72
    W1 = Tpad - ks1 + 1                             # 65
    W2 = W1 // 4                                    # 16
    ks3, pad3 = 16, 8
    W3a = W2 + 2 * pad3 - ks3 + 1                   # 17
    W3 = W3a // 8                                   # 2
    final_length = f2 * W3                          # 16
    C2 = f1 * d

    key = jax.random.PRNGKey(0)
    kk = jax.random.split(key, 20)
    nrm, uni = jax.random.normal, jax.random.uniform

    p = {
        'w1':  0.3 * nrm(kk[0], (f1, 1, 1, ks1), dtype=jnp.float32),
        'w2':  0.3 * nrm(kk[1], (C2, 1, E, 1), dtype=jnp.float32),
        'w3d': 0.3 * nrm(kk[2], (C2, 1, 1, ks3), dtype=jnp.float32),
        'wp':  0.3 * nrm(kk[3], (f2, C2, 1, 1), dtype=jnp.float32),
        'wfc': 0.5 * nrm(kk[4], (num_classes, final_length), dtype=jnp.float32),
        'bfc': 0.1 * nrm(kk[5], (num_classes,), dtype=jnp.float32),
        'g1':  1.0 + 0.1 * nrm(kk[6], (f1,), dtype=jnp.float32),
        'be1': 0.1 * nrm(kk[7], (f1,), dtype=jnp.float32),
        'm1':  0.1 * nrm(kk[8], (f1,), dtype=jnp.float32),
        'v1':  1.0 + 0.2 * uni(kk[9], (f1,), dtype=jnp.float32),
        'g2':  1.0 + 0.1 * nrm(kk[10], (C2,), dtype=jnp.float32),
        'be2': 0.1 * nrm(kk[11], (C2,), dtype=jnp.float32),
        'm2':  0.1 * nrm(kk[12], (C2,), dtype=jnp.float32),
        'v2':  1.0 + 0.2 * uni(kk[13], (C2,), dtype=jnp.float32),
        'g3':  1.0 + 0.1 * nrm(kk[14], (f2,), dtype=jnp.float32),
        'be3': 0.1 * nrm(kk[15], (f2,), dtype=jnp.float32),
        'm3':  0.1 * nrm(kk[16], (f2,), dtype=jnp.float32),
        'v3':  1.0 + 0.2 * uni(kk[17], (f2,), dtype=jnp.float32),
    }

    x = nrm(kk[18], (B, E, T), dtype=jnp.float32)   # PyTorch forward input (B, E, T)

    # glue: pad time (conv1 padding), flatten (e, time) into the matmul K axis, fold params
    xpad = jnp.pad(x, ((0, 0), (0, 0), (pad1, pad1)))
    x_flat = xpad.reshape(B, E * Tpad)

    folded = fold_eegnet_params(
        p, E=E, f1=f1, d=d, f2=f2, nc=num_classes, ks1=ks1,
        Tpad=Tpad, W1=W1, W2=W2, ks3=ks3, pad3=pad3, W3a=W3a, W3=W3)

    out = jax.block_until_ready(
        eegnet_pallas(x_flat, folded, num_classes=num_classes))

    ref = jax.block_until_ready(
        eegnet_reference(x, p, {'f1': f1, 'd': d, 'pad1': pad1}))

    assert out.shape == (B, num_classes)
    if not jnp.allclose(out, ref, rtol=1e-2, atol=1e-2):
        raise RuntimeError(
            f"Pallas/reference mismatch, max abs diff = "
            f"{float(jnp.max(jnp.abs(out - ref)))}")
    print("KERNEL_OK")
</pallas_src>

<mosaic_0001>
module attributes {stable_mosaic.version = 11 : i64} {
  func.func @_eegnet_kernel(%arg0: i32, %arg1: memref<2x288xf32, #tpu.memory_space<vmem>>, %arg2: memref<288x520xf32, #tpu.memory_space<vmem>>, %arg3: memref<1x520xf32, #tpu.memory_space<vmem>>, %arg4: memref<520x136xf32, #tpu.memory_space<vmem>>, %arg5: memref<1x136xf32, #tpu.memory_space<vmem>>, %arg6: memref<136x2xf32, #tpu.memory_space<vmem>>, %arg7: memref<1x2xf32, #tpu.memory_space<vmem>>, %arg8: memref<2x2xf32, #tpu.memory_space<vmem>>) attributes {dimension_semantics = [#tpu.dimension_semantics<parallel>], iteration_bounds = array<i64: 1>, scalar_prefetch = 0 : i64, scratch_operands = 0 : i64, tpu.core_type = #tpu.core_type<tc>, window_params = [{transform_indices = @transform_0, window_bounds = array<i64: 2, 288>}, {pipeline_mode = #tpu.pipeline_mode<synchronous>, transform_indices = @transform_1, window_bounds = array<i64: 288, 520>}, {pipeline_mode = #tpu.pipeline_mode<synchronous>, transform_indices = @transform_2, window_bounds = array<i64: 1, 520>}, {pipeline_mode = #tpu.pipeline_mode<synchronous>, transform_indices = @transform_3, window_bounds = array<i64: 520, 136>}, {pipeline_mode = #tpu.pipeline_mode<synchronous>, transform_indices = @transform_4, window_bounds = array<i64: 1, 136>}, {pipeline_mode = #tpu.pipeline_mode<synchronous>, transform_indices = @transform_5, window_bounds = array<i64: 136, 2>}, {pipeline_mode = #tpu.pipeline_mode<synchronous>, transform_indices = @transform_6, window_bounds = array<i64: 1, 2>}, {transform_indices = @transform_7, window_bounds = array<i64: 2, 2>}]} {
    %c0 = arith.constant 0 : index
    %c0_0 = arith.constant 0 : index
    %0 = vector.load %arg1[%c0, %c0_0] : memref<2x288xf32, #tpu.memory_space<vmem>>, vector<2x288xf32>
    %c0_1 = arith.constant 0 : index
    %c0_2 = arith.constant 0 : index
    %1 = vector.load %arg2[%c0_1, %c0_2] : memref<288x520xf32, #tpu.memory_space<vmem>>, vector<288x520xf32>
    %cst = arith.constant dense<0.000000e+00> : vector<2x520xf32>
    %2 = tpu.matmul %0, %1, %cst {dimension_numbers = #tpu.dot_dimension_numbers<[1], [0], [0], [1], [0, 0, 1, 1], [], []>} : vector<2x288xf32>, vector<288x520xf32>, vector<2x520xf32> -> vector<2x520xf32>
    %c0_3 = arith.constant 0 : index
    %c0_4 = arith.constant 0 : index
    %3 = vector.load %arg3[%c0_3, %c0_4] : memref<1x520xf32, #tpu.memory_space<vmem>>, vector<1x520xf32>
    %4 = vector.broadcast %3 : vector<1x520xf32> to vector<2x520xf32>
    %5 = arith.addf %2, %4 : vector<2x520xf32>
    %cst_5 = arith.constant 0.000000e+00 : f32
    %6 = vector.broadcast %cst_5 : f32 to vector<2x520xf32>
    %7 = arith.cmpf ogt, %5, %6 : vector<2x520xf32>
    %cst_6 = arith.constant 0.000000e+00 : f32
    %8 = vector.broadcast %cst_6 : f32 to vector<2x520xf32>
    %9 = arith.minimumf %5, %8 : vector<2x520xf32>
    %10 = math.exp %9 : vector<2x520xf32>
    %cst_7 = arith.constant 1.000000e+00 : f32
    %11 = vector.broadcast %cst_7 : f32 to vector<2x520xf32>
    %12 = arith.subf %10, %11 : vector<2x520xf32>
    %13 = arith.select %7, %5, %12 : vector<2x520xi1>, vector<2x520xf32>
    %c0_8 = arith.constant 0 : index
    %c0_9 = arith.constant 0 : index
    %14 = vector.load %arg4[%c0_8, %c0_9] : memref<520x136xf32, #tpu.memory_space<vmem>>, vector<520x136xf32>
    %cst_10 = arith.constant dense<0.000000e+00> : vector<2x136xf32>
    %15 = tpu.matmul %13, %14, %cst_10 {dimension_numbers = #tpu.dot_dimension_numbers<[1], [0], [0], [1], [0, 0, 1, 1], [], []>} : vector<2x520xf32>, vector<520x136xf32>, vector<2x136xf32> -> vector<2x136xf32>
    %c0_11 = arith.constant 0 : index
    %c0_12 = arith.constant 0 : index
    %16 = vector.load %arg5[%c0_11, %c0_12] : memref<1x136xf32, #tpu.memory_space<vmem>>, vector<1x136xf32>
    %17 = vector.broadcast %16 : vector<1x136xf32> to vector<2x136xf32>
    %18 = arith.addf %15, %17 : vector<2x136xf32>
    %cst_13 = arith.constant 0.000000e+00 : f32
    %19 = vector.broadcast %cst_13 : f32 to vector<2x136xf32>
    %20 = arith.cmpf ogt, %18, %19 : vector<2x136xf32>
    %cst_14 = arith.constant 0.000000e+00 : f32
    %21 = vector.broadcast %cst_14 : f32 to vector<2x136xf32>
    %22 = arith.minimumf %18, %21 : vector<2x136xf32>
    %23 = math.exp %22 : vector<2x136xf32>
    %cst_15 = arith.constant 1.000000e+00 : f32
    %24 = vector.broadcast %cst_15 : f32 to vector<2x136xf32>
    %25 = arith.subf %23, %24 : vector<2x136xf32>
    %26 = arith.select %20, %18, %25 : vector<2x136xi1>, vector<2x136xf32>
    %c0_16 = arith.constant 0 : index
    %c0_17 = arith.constant 0 : index
    %27 = vector.load %arg6[%c0_16, %c0_17] : memref<136x2xf32, #tpu.memory_space<vmem>>, vector<136x2xf32>
    %cst_18 = arith.constant dense<0.000000e+00> : vector<2x2xf32>
    %28 = tpu.matmul %26, %27, %cst_18 {dimension_numbers = #tpu.dot_dimension_numbers<[1], [0], [0], [1], [0, 0, 1, 1], [], []>} : vector<2x136xf32>, vector<136x2xf32>, vector<2x2xf32> -> vector<2x2xf32>
    %c0_19 = arith.constant 0 : index
    %c0_20 = arith.constant 0 : index
    %29 = vector.load %arg7[%c0_19, %c0_20] : memref<1x2xf32, #tpu.memory_space<vmem>>, vector<1x2xf32>
    %30 = vector.broadcast %29 : vector<1x2xf32> to vector<2x2xf32>
    %31 = arith.addf %28, %30 : vector<2x2xf32>
    %c0_21 = arith.constant 0 : index
    %c0_22 = arith.constant 0 : index
    %32 = vector.load %arg8[%c0_21, %c0_22] : memref<2x2xf32, #tpu.memory_space<vmem>>, vector<2x2xf32>
    tpu.vector_store %arg8[%c0_21, %c0_22], %31 {strides = array<i32>} : memref<2x2xf32, #tpu.memory_space<vmem>>, vector<2x2xf32>,
    return
  }
  func.func @transform_0(%arg0: i32) -> (i32, i32) {
    %c0_i32 = arith.constant 0 : i32
    %c0_i32_0 = arith.constant 0 : i32
    return %arg0, %c0_i32 : i32, i32
  }
  func.func @transform_1(%arg0: i32) -> (i32, i32) {
    %c0_i32 = arith.constant 0 : i32
    %c0_i32_0 = arith.constant 0 : i32
    %c0_i32_1 = arith.constant 0 : i32
    return %c0_i32, %c0_i32_0 : i32, i32
  }
  func.func @transform_2(%arg0: i32) -> (i32, i32) {
    %c0_i32 = arith.constant 0 : i32
    %c0_i32_0 = arith.constant 0 : i32
    %c0_i32_1 = arith.constant 0 : i32
    return %c0_i32, %c0_i32_0 : i32, i32
  }
  func.func @transform_3(%arg0: i32) -> (i32, i32) {
    %c0_i32 = arith.constant 0 : i32
    %c0_i32_0 = arith.constant 0 : i32
    %c0_i32_1 = arith.constant 0 : i32
    return %c0_i32, %c0_i32_0 : i32, i32
  }
  func.func @transform_4(%arg0: i32) -> (i32, i32) {
    %c0_i32 = arith.constant 0 : i32
    %c0_i32_0 = arith.constant 0 : i32
    %c0_i32_1 = arith.constant 0 : i32
    return %c0_i32, %c0_i32_0 : i32, i32
  }
  func.func @transform_5(%arg0: i32) -> (i32, i32) {
    %c0_i32 = arith.constant 0 : i32
    %c0_i32_0 = arith.constant 0 : i32
    %c0_i32_1 = arith.constant 0 : i32
    return %c0_i32, %c0_i32_0 : i32, i32
  }
  func.func @transform_6(%arg0: i32) -> (i32, i32) {
    %c0_i32 = arith.constant 0 : i32
    %c0_i32_0 = arith.constant 0 : i32
    %c0_i32_1 = arith.constant 0 : i32
    return %c0_i32, %c0_i32_0 : i32, i32
  }
  func.func @transform_7(%arg0: i32) -> (i32, i32) {
    %c0_i32 = arith.constant 0 : i32
    %c0_i32_0 = arith.constant 0 : i32
    return %arg0, %c0_i32 : i32, i32
  }
}

</mosaic_0001>

<llo_original>
// kernel: tpu_custom_call.1
$region0: #{tpu_custom_call.1}
  #allocation0 [shape = 'u32[]', space=smem, size = 0x4, offset = 0x4, fixed_abs, tag = 'smem constant byte address 0x4 - core index']
  #allocation1 [shape = 'u32[144,128]{1,0:T(1,128)}', space=vmem, size = 0x12000, scoped, tag = 'internal scratch']
  %s0 = inlined_call_operand.vmem [shape: f32[2,288], index: 0, kind: input, shape index: {}]
  %s1 = inlined_call_operand.vmem [shape: f32[288,520], index: 1, kind: input, shape index: {}]
  %s2 = inlined_call_operand.vmem [shape: f32[1,520], index: 2, kind: input, shape index: {}]
  %s3 = inlined_call_operand.vmem [shape: f32[520,136], index: 3, kind: input, shape index: {}]
  %s4 = inlined_call_operand.vmem [shape: f32[1,136], index: 4, kind: input, shape index: {}]
  %s5 = inlined_call_operand.vmem [shape: f32[136,2], index: 5, kind: input, shape index: {}]
  %s6 = inlined_call_operand.vmem [shape: f32[1,2], index: 6, kind: input, shape index: {}]
  %s7 = inlined_call_operand.hbm [shape: f32[2,2], index: 7, kind: output, shape index: {}]
  %s8 = sld [smem:[#allocation0]]
  $region38: #{tpu_custom_call.1} parent=0
    _
  %s10 = ssub.s32 1, %s8
  %s11 = scalar_select 0, %s10, %s8
  $region1: #{tpu_custom_call.1} parent=0
    #allocation2 [shape = 'u8[1024]{0}', space=vmem, size = 0x400, scoped, tag = 'output window, operand 0, single buffered']
    #allocation3 [shape = 's32[1]{0}', space=sflag, size = 0x4, scoped, tag = 'scoped memory for tpu_custom_call.1']
    %12 = vsyncpa [#allocation3], 0
    // Predicated region
    $region2: #{tpu_custom_call.1} parent=1 // pred_check
      _
    $region3: #{tpu_custom_call.1} parent=1 // pred_check_branch
      %14 = sbr.rel (0) target = $region5
    $region4: #{tpu_custom_call.1} parent=1 // pred_region
      _
    $region5: #{tpu_custom_call.1} parent=1 // pred_fallthru
      _
    // Predicated region
    $region6: #{tpu_custom_call.1} parent=1 // pred_check
      _
    $region7: #{tpu_custom_call.1} parent=1 // pred_check_branch
      %16 = sbr.rel (0) target = $region9
    $region8: #{tpu_custom_call.1} parent=1 // pred_region
      _
    $region9: #{tpu_custom_call.1} parent=1 // pred_fallthru
      _
    // Predicated region
    $region10: #{tpu_custom_call.1} parent=1 // pred_check
      _
    $region11: #{tpu_custom_call.1} parent=1 // pred_check_branch
      %18 = sbr.rel (0) target = $region13
    $region12: #{tpu_custom_call.1} parent=1 // pred_region
      _
    $region13: #{tpu_custom_call.1} parent=1 // pred_fallthru
      _
    // Predicated region
    $region14: #{tpu_custom_call.1} parent=1 // pred_check
      _
    $region15: #{tpu_custom_call.1} parent=1 // pred_check_branch
      %20 = sbr.rel (0) target = $region17
    $region16: #{tpu_custom_call.1} parent=1 // pred_region
      _
    $region17: #{tpu_custom_call.1} parent=1 // pred_fallthru
      _
    // Predicated region
    $region18: #{tpu_custom_call.1} parent=1 // pred_check
      _
    $region19: #{tpu_custom_call.1} parent=1 // pred_check_branch
      %22 = sbr.rel (0) target = $region21
    $region20: #{tpu_custom_call.1} parent=1 // pred_region
      _
    $region21: #{tpu_custom_call.1} parent=1 // pred_fallthru
      _
    // Predicated region
    $region22: #{tpu_custom_call.1} parent=1 // pred_check
      _
    $region23: #{tpu_custom_call.1} parent=1 // pred_check_branch
      %24 = sbr.rel (0) target = $region25
    $region24: #{tpu_custom_call.1} parent=1 // pred_region
      _
    $region25: #{tpu_custom_call.1} parent=1 // pred_fallthru
      _
    // Predicated region
    $region26: #{tpu_custom_call.1} parent=1 // pred_check
      _
    $region27: #{tpu_custom_call.1} parent=1 // pred_check_branch
      %26 = sbr.rel (0) target = $region29
    $region28: #{tpu_custom_call.1} parent=1 // pred_region
      _
    $region29: #{tpu_custom_call.1} parent=1 // pred_fallthru
      _
    %v27 = vld [vmem:[%s0] sm:$0x3f]
    %v28 = vld [vmem:[%s1] sm:$0xff]
    %v29 = vld [vmem:[%s1 + $0x8] sm:$0xff]
    %v30 = vld [vmem:[%s1 + $0x10] sm:$0xff]
    %v31 = vld [vmem:[%s1 + $0x18] sm:$0xff]
    %v32 = vld [vmem:[%s1 + $0x20] sm:$0xff]
    %v33 = vld [vmem:[%s1 + $0x28] sm:$0xff]
    %v34 = vld [vmem:[%s1 + $0x30] sm:$0xff]
    %v35 = vld [vmem:[%s1 + $0x38] sm:$0xff]
    %v36 = vld [vmem:[%s1 + $0x40] sm:$0xff]
    %v37 = vld [vmem:[%s1 + $0x48] sm:$0xff]
    %v38 = vld [vmem:[%s1 + $0x50] sm:$0xff]
    %v39 = vld [vmem:[%s1 + $0x58] sm:$0xff]
    %v40 = vld [vmem:[%s1 + $0x60] sm:$0xff]
    %v41 = vld [vmem:[%s1 + $0x68] sm:$0xff]
    %v42 = vld [vmem:[%s1 + $0x70] sm:$0xff]
    %v43 = vld [vmem:[%s1 + $0x78] sm:$0xff]
    %v44 = vld [vmem:[%s1 + $0x80] sm:$0xff]
    %v45 = vld [vmem:[%s1 + $0x88] sm:$0xff]
    %v46 = vld [vmem:[%s1 + $0x90] sm:$0xff]
    %v47 = vld [vmem:[%s1 + $0x98] sm:$0xff]
    %v48 = vld [vmem:[%s1 + $0xa0] sm:$0xff]
    %v49 = vld [vmem:[%s1 + $0xa8] sm:$0xff]
    %v50 = vld [vmem:[%s1 + $0xb0] sm:$0xff]
    %v51 = vld [vmem:[%s1 + $0xb8] sm:$0xff]
    %v52 = vld [vmem:[%s1 + $0xc0] sm:$0xff]
    %v53 = vld [vmem:[%s1 + $0xc8] sm:$0xff]
    %v54 = vld [vmem:[%s1 + $0xd0] sm:$0xff]
    %v55 = vld [vmem:[%s1 + $0xd8] sm:$0xff]
    %v56 = vld [vmem:[%s1 + $0xe0] sm:$0xff]
    %v57 = vld [vmem:[%s1 + $0xe8] sm:$0xff]
    %v58 = vld [vmem:[%s1 + $0xf0] sm:$0xff]
    %v59 = vld [vmem:[%s1 + $0xf8] sm:$0xff]
    %v60 = vld [vmem:[%s1 + $0x100] sm:$0xff]
    %v61 = vld [vmem:[%s1 + $0x108] sm:$0xff]
    %v62 = vld [vmem:[%s1 + $0x110] sm:$0xff]
    %v63 = vld [vmem:[%s1 + $0x118] sm:$0xff]
    %v64 = vld [vmem:[%s1 + $0x120] sm:$0xff]
    %v65 = vld [vmem:[%s1 + $0x128] sm:$0xff]
    %v66 = vld [vmem:[%s1 + $0x130] sm:$0xff]
    %v67 = vld [vmem:[%s1 + $0x138] sm:$0xff]
    %v68 = vld [vmem:[%s1 + $0x140] sm:$0xff]
    %v69 = vld [vmem:[%s1 + $0x148] sm:$0xff]
    %v70 = vld [vmem:[%s1 + $0x150] sm:$0xff]
    %v71 = vld [vmem:[%s1 + $0x158] sm:$0xff]
    %v72 = vld [vmem:[%s1 + $0x160] sm:$0xff]
    %v73 = vld [vmem:[%s1 + $0x168] sm:$0xff]
    %v74 = vld [vmem:[%s1 + $0x170] sm:$0xff]
    %v75 = vld [vmem:[%s1 + $0x178] sm:$0xff]
    %v76 = vld [vmem:[%s1 + $0x180] sm:$0xff]
    %v77 = vld [vmem:[%s1 + $0x188] sm:$0xff]
    %v78 = vld [vmem:[%s1 + $0x190] sm:$0xff]
    %v79 = vld [vmem:[%s1 + $0x198] sm:$0xff]
    %v80 = vld [vmem:[%s1 + $0x1a0] sm:$0xff]
    %v81 = vld [vmem:[%s1 + $0x1a8] sm:$0xff]
    %v82 = vld [vmem:[%s1 + $0x1b0] sm:$0xff]
    %v83 = vld [vmem:[%s1 + $0x1b8] sm:$0xff]
    %v84 = vld [vmem:[%s1 + $0x1c0] sm:$0xff]
    %v85 = vld [vmem:[%s1 + $0x1c8] sm:$0xff]
    %v86 = vld [vmem:[%s1 + $0x1d0] sm:$0xff]
    %v87 = vld [vmem:[%s1 + $0x1d8] sm:$0xff]
    %v88 = vld [vmem:[%s1 + $0x1e0] sm:$0xff]
    %v89 = vld [vmem:[%s1 + $0x1e8] sm:$0xff]
    %v90 = vld [vmem:[%s1 + $0x1f0] sm:$0xff]
    %v91 = vld [vmem:[%s1 + $0x1f8] sm:$0xff]
    %v92 = vld [vmem:[%s1 + $0x200] sm:$0xff]
    %v93 = vld [vmem:[%s1 + $0x208] sm:$0xff]
    %v94 = vld [vmem:[%s1 + $0x210] sm:$0xff]
    %v95 = vld [vmem:[%s1 + $0x218] sm:$0xff]
    %v96 = vld [vmem:[%s1 + $0x220] sm:$0xff]
    %v97 = vld [vmem:[%s1 + $0x228] sm:$0xff]
    %v98 = vld [vmem:[%s1 + $0x230] sm:$0xff]
    %v99 = vld [vmem:[%s1 + $0x238] sm:$0xff]
    %v100 = vld [vmem:[%s1 + $0x240] sm:$0xff]
    %v101 = vld [vmem:[%s1 + $0x248] sm:$0xff]
    %v102 = vld [vmem:[%s1 + $0x250] sm:$0xff]
    %v103 = vld [vmem:[%s1 + $0x258] sm:$0xff]
    %v104 = vld [vmem:[%s1 + $0x260] sm:$0xff]
    %v105 = vld [vmem:[%s1 + $0x268] sm:$0xff]
    %v106 = vld [vmem:[%s1 + $0x270] sm:$0xff]
    %v107 = vld [vmem:[%s1 + $0x278] sm:$0xff]
    %v108 = vld [vmem:[%s1 + $0x280] sm:$0xff]
    %v109 = vld [vmem:[%s1 + $0x288] sm:$0xff]
    %v110 = vld [vmem:[%s1 + $0x290] sm:$0xff]
    %v111 = vld [vmem:[%s1 + $0x298] sm:$0xff]
    %v112 = vld [vmem:[%s1 + $0x2a0] sm:$0xff]
    %v113 = vld [vmem:[%s1 + $0x2a8] sm:$0xff]
    %v114 = vld [vmem:[%s1 + $0x2b0] sm:$0xff]
    %v115 = vld [vmem:[%s1 + $0x2b8] sm:$0xff]
    %v116 = vld [vmem:[%s1 + $0x2c0] sm:$0xff]
    %v117 = vld [vmem:[%s1 + $0x2c8] sm:$0xff]
    %v118 = vld [vmem:[%s1 + $0x2d0] sm:$0xff]
    %v119 = vld [vmem:[%s1 + $0x2d8] sm:$0xff]
    %v120 = vld [vmem:[%s1 + $0x2e0] sm:$0xff]
    %v121 = vld [vmem:[%s1 + $0x2e8] sm:$0xff]
    %v122 = vld [vmem:[%s1 + $0x2f0] sm:$0xff]
    %v123 = vld [vmem:[%s1 + $0x2f8] sm:$0xff]
    %v124 = vld [vmem:[%s1 + $0x300] sm:$0xff]
    %v125 = vld [vmem:[%s1 + $0x308] sm:$0xff]
    %v126 = vld [vmem:[%s1 + $0x310] sm:$0xff]
    %v127 = vld [vmem:[%s1 + $0x318] sm:$0xff]
    %v128 = vld [vmem:[%s1 + $0x320] sm:$0xff]
    %v129 = vld [vmem:[%s1 + $0x328] sm:$0xff]
    %v130 = vld [vmem:[%s1 + $0x330] sm:$0xff]
    %v131 = vld [vmem:[%s1 + $0x338] sm:$0xff]
    %v132 = vld [vmem:[%s1 + $0x340] sm:$0xff]
    %v133 = vld [vmem:[%s1 + $0x348] sm:$0xff]
    %v134 = vld [vmem:[%s1 + $0x350] sm:$0xff]
    %v135 = vld [vmem:[%s1 + $0x358] sm:$0xff]
    %v136 = vld [vmem:[%s1 + $0x360] sm:$0xff]
    %v137 = vld [vmem:[%s1 + $0x368] sm:$0xff]
    %v138 = vld [vmem:[%s1 + $0x370] sm:$0xff]
    %v139 = vld [vmem:[%s1 + $0x378] sm:$0xff]
    %v140 = vld [vmem:[%s1 + $0x380] sm:$0xff]
    %v141 = vld [vmem:[%s1 + $0x388] sm:$0xff]
    %v142 = vld [vmem:[%s1 + $0x390] sm:$0xff]
    %v143 = vld [vmem:[%s1 + $0x398] sm:$0xff]
    %v144 = vld [vmem:[%s1 + $0x3a0] sm:$0xff]
    %v145 = vld [vmem:[%s1 + $0x3a8] sm:$0xff]
    %v146 = vld [vmem:[%s1 + $0x3b0] sm:$0xff]
    %v147 = vld [vmem:[%s1 + $0x3b8] sm:$0xff]
    %v148 = vld [vmem:[%s1 + $0x3c0] sm:$0xff]
    %v149 = vld [vmem:[%s1 + $0x3c8] sm:$0xff]
    %v150 = vld [vmem:[%s1 + $0x3d0] sm:$0xff]
    %v151 = vld [vmem:[%s1 + $0x3d8] sm:$0xff]
    %v152 = vld [vmem:[%s1 + $0x3e0] sm:$0xff]
    %v153 = vld [vmem:[%s1 + $0x3e8] sm:$0xff]
    %v154 = vld [vmem:[%s1 + $0x3f0] sm:$0xff]
    %v155 = vld [vmem:[%s1 + $0x3f8] sm:$0xff]
    %v156 = vld [vmem:[%s1 + $0x400] sm:$0xff]
    %v157 = vld [vmem:[%s1 + $0x408] sm:$0xff]
    %v158 = vld [vmem:[%s1 + $0x410] sm:$0xff]
    %v159 = vld [vmem:[%s1 + $0x418] sm:$0xff]
    %v160 = vld [vmem:[%s1 + $0x420] sm:$0xff]
    %v161 = vld [vmem:[%s1 + $0x428] sm:$0xff]
    %v162 = vld [vmem:[%s1 + $0x430] sm:$0xff]
    %v163 = vld [vmem:[%s1 + $0x438] sm:$0xff]
    %v164 = vld [vmem:[%s1 + $0x440] sm:$0xff]
    %v165 = vld [vmem:[%s1 + $0x448] sm:$0xff]
    %v166 = vld [vmem:[%s1 + $0x450] sm:$0xff]
    %v167 = vld [vmem:[%s1 + $0x458] sm:$0xff]
    %v168 = vld [vmem:[%s1 + $0x460] sm:$0xff]
    %v169 = vld [vmem:[%s1 + $0x468] sm:$0xff]
    %v170 = vld [vmem:[%s1 + $0x470] sm:$0xff]
    %v171 = vld [vmem:[%s1 + $0x478] sm:$0xff]
    %v172 = vld [vmem:[%s1 + $0x480] sm:$0xff]
    %v173 = vld [vmem:[%s1 + $0x488] sm:$0xff]
    %v174 = vld [vmem:[%s1 + $0x490] sm:$0xff]
    %v175 = vld [vmem:[%s1 + $0x498] sm:$0xff]
    %v176 = vld [vmem:[%s1 + $0x4a0] sm:$0xff]
    %v177 = vld [vmem:[%s1 + $0x4a8] sm:$0xff]
    %v178 = vld [vmem:[%s1 + $0x4b0] sm:$0xff]
    %v179 = vld [vmem:[%s1 + $0x4b8] sm:$0xff]
    %v180 = vld [vmem:[%s1 + $0x4c0] sm:$0xff]
    %v181 = vld [vmem:[%s1 + $0x4c8] sm:$0xff]
    %v182 = vld [vmem:[%s1 + $0x4d0] sm:$0xff]
    %v183 = vld [vmem:[%s1 + $0x4d8] sm:$0xff]
    %v184 = vld [vmem:[%s1 + $0x4e0] sm:$0xff]
    %v185 = vld [vmem:[%s1 + $0x4e8] sm:$0xff]
    %v186 = vld [vmem:[%s1 + $0x4f0] sm:$0xff]
    %v187 = vld [vmem:[%s1 + $0x4f8] sm:$0xff]
    %v188 = vld [vmem:[%s1 + $0x500] sm:$0xff]
    %v189 = vld [vmem:[%s1 + $0x508] sm:$0xff]
    %v190 = vld [vmem:[%s1 + $0x510] sm:$0xff]
    %v191 = vld [vmem:[%s1 + $0x518] sm:$0xff]
    %v192 = vld [vmem:[%s1 + $0x520] sm:$0xff]
    %v193 = vld [vmem:[%s1 + $0x528] sm:$0xff]
    %v194 = vld [vmem:[%s1 + $0x530] sm:$0xff]
    %v195 = vld [vmem:[%s1 + $0x538] sm:$0xff]
    %v196 = vld [vmem:[%s1 + $0x540] sm:$0xff]
    %v197 = vld [vmem:[%s1 + $0x548] sm:$0xff]
    %v198 = vld [vmem:[%s1 + $0x550] sm:$0xff]
    %v199 = vld [vmem:[%s1 + $0x558] sm:$0xff]
    %v200 = vld [vmem:[%s1 + $0x560] sm:$0xff]
    %v201 = vld [vmem:[%s1 + $0x568] sm:$0xff]
    %v202 = vld [vmem:[%s1 + $0x570] sm:$0xff]
    %v203 = vld [vmem:[%s1 + $0x578] sm:$0xff]
    %v204 = vld [vmem:[%s1 + $0x580] sm:$0xff]
    %v205 = vld [vmem:[%s1 + $0x588] sm:$0xff]
    %v206 = vld [vmem:[%s1 + $0x590] sm:$0xff]
    %v207 = vld [vmem:[%s1 + $0x598] sm:$0xff]
    %v208 = vld [vmem:[%s2] sm:$0x1f]
    %v210 = vlaneseq
    %v211 = vshrl.u32 %v210, 7
    %v212 = vsub.s32 0, %v211
    %v213 = vrot.slane %v208, %v212
    %v214 = vlaneseq
    %v215 = vshrl.u32 %v214, 7
    %v216 = vsub.s32 1, %v215
    %v217 = vrot.slane %v208, %v216
    %v218 = vlaneseq
    %v219 = vshrl.u32 %v218, 7
    %v220 = vsub.s32 2, %v219
    %v221 = vrot.slane %v208, %v220
    %v222 = vlaneseq
    %v223 = vshrl.u32 %v222, 7
    %v224 = vsub.s32 3, %v223
    %v225 = vrot.slane %v208, %v224
    %v226 = vlaneseq
    %v227 = vshrl.u32 %v226, 7
    %v228 = vsub.s32 4, %v227
    %v229 = vrot.slane %v208, %v228
    %v236 = vcombine.high %v27, %v27
    %v238 = vunpack.c.l.s4 1983009808
    %v239 = vunpack.c.0.s8 %v238
    %v240 = vlaneseq
    %v241 = vshrl.u32 %v240, 7
    %v242 = vsub.s32 %v239, %v241
    %v243 = vrot.slane %v27, %v242
    %v245 = vunpack.c.l.s4 1983009808
    %v246 = vunpack.c.0.s8 %v245
    %v247 = vlaneseq
    %v248 = vshrl.u32 %v247, 7
    %v249 = vsub.s32 %v246, %v248
    %v250 = vrot.slane %v236, %v249
    %v251 = vcombine.high %v243, %v243
    %vm254 = vcmask 261120
    %v255 = vsel %vm254, %v250, 0
    %257 = vmatprep.subr.mxu0 %v29
    %258 = vmatpush1.msra.mxu0 %v28
    %259 = vmatprep.subr.mxu0 %v34
    %260 = vmatpush1.msra.mxu0 %v33
    %261 = vmatprep.subr.mxu0 %v39
    %262 = vmatpush1.msra.mxu0 %v38
    %263 = vmatprep.subr.mxu0 %v44
    %264 = vmatpush1.msra.mxu0 %v43
    %265 = vmatprep.subr.mxu0 %v49
    %266 = vmatpush1.msra.mxu0 %v48
    %267 = vmatprep.subr.mxu0 %v54
    %268 = vmatpush1.msra.mxu0 %v53
    %269 = vmatprep.subr.mxu0 %v59
    %270 = vmatpush1.msra.mxu0 %v58
    %271 = vmatprep.subr.mxu0 %v64
    %272 = vmatpush1.msra.mxu0 %v63
    %273 = vmatprep.subr.mxu0 %v69
    %274 = vmatpush1.msra.mxu0 %v68
    %275 = vmatprep.subr.mxu0 %v74
    %276 = vmatpush1.msra.mxu0 %v73
    %277 = vmatprep.subr.mxu0 %v79
    %278 = vmatpush1.msra.mxu0 %v78
    %279 = vmatprep.subr.mxu0 %v84
    %280 = vmatpush1.msra.mxu0 %v83
    %281 = vmatprep.subr.mxu0 %v89
    %282 = vmatpush1.msra.mxu0 %v88
    %283 = vmatprep.subr.mxu0 %v94
    %284 = vmatpush1.msra.mxu0 %v93
    %285 = vmatprep.subr.mxu0 %v99
    %286 = vmatpush1.msra.mxu0 %v98
    %287 = vmatprep.subr.mxu0 %v104
    %288 = vmatpush1.msra.mxu0 %v103
    %289 = vmatprep.subr.mxu0 %v109
    %290 = vmatpush1.msra.mxu0 %v108
    %291 = vmatprep.subr.mxu0 %v114
    %292 = vmatpush1.msra.mxu0 %v113
    %293 = vmatprep.subr.mxu0 %v119
    %294 = vmatpush1.msra.mxu0 %v118
    %295 = vmatprep.subr.mxu0 %v124
    %296 = vmatpush1.msra.mxu0 %v123
    %297 = vmatprep.subr.mxu0 %v129
    %298 = vmatpush1.msra.mxu0 %v128
    %299 = vmatprep.subr.mxu0 %v134
    %300 = vmatpush1.msra.mxu0 %v133
    %301 = vmatprep.subr.mxu0 %v139
    %302 = vmatpush1.msra.mxu0 %v138
    %303 = vmatprep.subr.mxu0 %v144
    %304 = vmatpush1.msra.mxu0 %v143
    %305 = vmatprep.subr.mxu0 %v149
    %306 = vmatpush1.msra.mxu0 %v148
    %307 = vmatprep.subr.mxu0 %v154
    %308 = vmatpush1.msra.mxu0 %v153
    %309 = vmatprep.subr.mxu0 %v159
    %310 = vmatpush1.msra.mxu0 %v158
    %311 = vmatprep.subr.mxu0 %v164
    %312 = vmatpush1.msra.mxu0 %v163
    %313 = vmatprep.subr.mxu0 %v169
    %314 = vmatpush1.msra.mxu0 %v168
    %315 = vmatprep.subr.mxu0 %v174
    %316 = vmatpush1.msra.mxu0 %v173
    %317 = vmatprep.subr.mxu0 %v179
    %318 = vmatpush1.msra.mxu0 %v178
    %319 = vmatprep.subr.mxu0 %v184
    %320 = vmatpush1.msra.mxu0 %v183
    %321 = vmatprep.mubr.f32.mxu0 %v251
    %322 = vmatmul.mubr.f32.gmra.mrb[0].mxu0 %v243
    %v323 = vpop.f32.mrb[0].mxu0
    %v324 = vadd.f32 %v213, %v323
    %v325 = vpop.f32.mrb[0].mxu0
    %v326 = vadd.f32 %v217, %v325
    %327 = vdwg.mxu0
    %328 = vmatprep.subr.mxu0 %v189
    %329 = vmatpush1.msra.mxu0 %v188
    %330 = vmatprep.subr.mxu0 %v194
    %331 = vmatpush1.msra.mxu0 %v193
    %332 = vmatprep.subr.mxu0 %v199
    %333 = vmatpush1.msra.mxu0 %v198
    %334 = vmatprep.subr.mxu0 %v204
    %335 = vmatpush1.msra.mxu0 %v203
    %336 = vmatprep.subr.mxu0 0.0
    %337 = vmatpush1.msra.mxu0 0.0
    %338 = vmatprep.subr.mxu0 0.0
    %339 = vmatpush1.msra.mxu0 0.0
    %340 = vmatprep.subr.mxu0 0.0
    %341 = vmatpush1.msra.mxu0 0.0
    %342 = vmatprep.subr.mxu0 0.0
    %343 = vmatpush1.msra.mxu0 0.0
    %344 = vmatprep.subr.mxu0 0.0
    %345 = vmatpush1.msra.mxu0 0.0
    %346 = vmatprep.subr.mxu0 0.0
    %347 = vmatpush1.msra.mxu0 0.0
    %348 = vmatprep.subr.mxu0 0.0
    %349 = vmatpush1.msra.mxu0 0.0
    %350 = vmatprep.subr.mxu0 0.0
    %351 = vmatpush1.msra.mxu0 0.0
    %352 = vmatprep.subr.mxu0 0.0
    %353 = vmatpush1.msra.mxu0 0.0
    %354 = vmatprep.subr.mxu0 0.0
    %355 = vmatpush1.msra.mxu0 0.0
    %356 = vmatprep.subr.mxu0 0.0
    %357 = vmatpush1.msra.mxu0 0.0
    %358 = vmatprep.subr.mxu0 0.0
    %359 = vmatpush1.msra.mxu0 0.0
    %360 = vmatprep.subr.mxu0 0.0
    %361 = vmatpush1.msra.mxu0 0.0
    %362 = vmatprep.subr.mxu0 0.0
    %363 = vmatpush1.msra.mxu0 0.0
    %364 = vmatprep.subr.mxu0 0.0
    %365 = vmatpush1.msra.mxu0 0.0
    %366 = vmatprep.subr.mxu0 0.0
    %367 = vmatpush1.msra.mxu0 0.0
    %368 = vmatprep.subr.mxu0 0.0
    %369 = vmatpush1.msra.mxu0 0.0
    %370 = vmatprep.subr.mxu0 0.0
    %371 = vmatpush1.msra.mxu0 0.0
    %372 = vmatprep.subr.mxu0 0.0
    %373 = vmatpush1.msra.mxu0 0.0
    %374 = vmatprep.subr.mxu0 0.0
    %375 = vmatpush1.msra.mxu0 0.0
    %376 = vmatprep.subr.mxu0 0.0
    %377 = vmatpush1.msra.mxu0 0.0
    %378 = vmatprep.subr.mxu0 0.0
    %379 = vmatpush1.msra.mxu0 0.0
    %380 = vmatprep.subr.mxu0 0.0
    %381 = vmatpush1.msra.mxu0 0.0
    %382 = vmatprep.subr.mxu0 0.0
    %383 = vmatpush1.msra.mxu0 0.0
    %384 = vmatprep.subr.mxu0 0.0
    %385 = vmatpush1.msra.mxu0 0.0
    %386 = vmatprep.subr.mxu0 0.0
    %387 = vmatpush1.msra.mxu0 0.0
    %388 = vmatprep.subr.mxu0 0.0
    %389 = vmatpush1.msra.mxu0 0.0
    %390 = vmatprep.subr.mxu0 0.0
    %391 = vmatpush1.msra.mxu0 0.0
    %392 = vmatprep.mubr.f32.mxu0 0.0
    %393 = vmatmul.mubr.f32.gmra.mrb[0].mxu0 %v255
    %v394 = vpop.f32.mrb[0].mxu0
    %v395 = vadd.f32 %v324, %v394
    %v396 = vpop.f32.mrb[0].mxu0
    %v397 = vadd.f32 %v326, %v396
    %398 = vdwg.mxu0
    %399 = vmatprep.subr.mxu0 %v31
    %400 = vmatpush1.msra.mxu0 %v30
    %401 = vmatprep.subr.mxu0 %v36
    %402 = vmatpush1.msra.mxu0 %v35
    %403 = vmatprep.subr.mxu0 %v41
    %404 = vmatpush1.msra.mxu0 %v40
    %405 = vmatprep.subr.mxu0 %v46
    %406 = vmatpush1.msra.mxu0 %v45
    %407 = vmatprep.subr.mxu0 %v51
    %408 = vmatpush1.msra.mxu0 %v50
    %409 = vmatprep.subr.mxu0 %v56
    %410 = vmatpush1.msra.mxu0 %v55
    %411 = vmatprep.subr.mxu0 %v61
    %412 = vmatpush1.msra.mxu0 %v60
    %413 = vmatprep.subr.mxu0 %v66
    %414 = vmatpush1.msra.mxu0 %v65
    %415 = vmatprep.subr.mxu0 %v71
    %416 = vmatpush1.msra.mxu0 %v70
    %417 = vmatprep.subr.mxu0 %v76
    %418 = vmatpush1.msra.mxu0 %v75
    %419 = vmatprep.subr.mxu0 %v81
    %420 = vmatpush1.msra.mxu0 %v80
    %421 = vmatprep.subr.mxu0 %v86
    %422 = vmatpush1.msra.mxu0 %v85
    %423 = vmatprep.subr.mxu0 %v91
    %424 = vmatpush1.msra.mxu0 %v90
    %425 = vmatprep.subr.mxu0 %v96
    %426 = vmatpush1.msra.mxu0 %v95
    %427 = vmatprep.subr.mxu0 %v101
    %428 = vmatpush1.msra.mxu0 %v100
    %429 = vmatprep.subr.mxu0 %v106
    %430 = vmatpush1.msra.mxu0 %v105
    %431 = vmatprep.subr.mxu0 %v111
    %432 = vmatpush1.msra.mxu0 %v110
    %433 = vmatprep.subr.mxu0 %v116
    %434 = vmatpush1.msra.mxu0 %v115
    %435 = vmatprep.subr.mxu0 %v121
    %436 = vmatpush1.msra.mxu0 %v120
    %437 = vmatprep.subr.mxu0 %v126
    %438 = vmatpush1.msra.mxu0 %v125
    %439 = vmatprep.subr.mxu0 %v131
    %440 = vmatpush1.msra.mxu0 %v130
    %441 = vmatprep.subr.mxu0 %v136
    %442 = vmatpush1.msra.mxu0 %v135
    %443 = vmatprep.subr.mxu0 %v141
    %444 = vmatpush1.msra.mxu0 %v140
    %445 = vmatprep.subr.mxu0 %v146
    %446 = vmatpush1.msra.mxu0 %v145
    %447 = vmatprep.subr.mxu0 %v151
    %448 = vmatpush1.msra.mxu0 %v150
    %449 = vmatprep.subr.mxu0 %v156
    %450 = vmatpush1.msra.mxu0 %v155
    %451 = vmatprep.subr.mxu0 %v161
    %452 = vmatpush1.msra.mxu0 %v160
    %453 = vmatprep.subr.mxu0 %v166
    %454 = vmatpush1.msra.mxu0 %v165
    %455 = vmatprep.subr.mxu0 %v171
    %456 = vmatpush1.msra.mxu0 %v170
    %457 = vmatprep.subr.mxu0 %v176
    %458 = vmatpush1.msra.mxu0 %v175
    %459 = vmatprep.subr.mxu0 %v181
    %460 = vmatpush1.msra.mxu0 %v180
    %461 = vmatprep.subr.mxu0 %v186
    %462 = vmatpush1.msra.mxu0 %v185
    %463 = vmatprep.mubr.f32.mxu0 %v251
    %464 = vmatmul.mubr.f32.gmra.mrb[0].mxu0 %v243
    %v465 = vpop.f32.mrb[0].mxu0
    %v466 = vadd.f32 %v221, %v465
    %v467 = vpop.f32.mrb[0].mxu0
    %v468 = vadd.f32 %v225, %v467
    %469 = vdwg.mxu0
    %470 = vmatprep.subr.mxu0 %v191
    %471 = vmatpush1.msra.mxu0 %v190
    %472 = vmatprep.subr.mxu0 %v196
    %473 = vmatpush1.msra.mxu0 %v195
    %474 = vmatprep.subr.mxu0 %v201
    %475 = vmatpush1.msra.mxu0 %v200
    %476 = vmatprep.subr.mxu0 %v206
    %477 = vmatpush1.msra.mxu0 %v205
    %478 = vmatprep.subr.mxu0 0.0
    %479 = vmatpush1.msra.mxu0 0.0
    %480 = vmatprep.subr.mxu0 0.0
    %481 = vmatpush1.msra.mxu0 0.0
    %482 = vmatprep.subr.mxu0 0.0
    %483 = vmatpush1.msra.mxu0 0.0
    %484 = vmatprep.subr.mxu0 0.0
    %485 = vmatpush1.msra.mxu0 0.0
    %486 = vmatprep.subr.mxu0 0.0
    %487 = vmatpush1.msra.mxu0 0.0
    %488 = vmatprep.subr.mxu0 0.0
    %489 = vmatpush1.msra.mxu0 0.0
    %490 = vmatprep.subr.mxu0 0.0
    %491 = vmatpush1.msra.mxu0 0.0
    %492 = vmatprep.subr.mxu0 0.0
    %493 = vmatpush1.msra.mxu0 0.0
    %494 = vmatprep.subr.mxu0 0.0
    %495 = vmatpush1.msra.mxu0 0.0
    %496 = vmatprep.subr.mxu0 0.0
    %497 = vmatpush1.msra.mxu0 0.0
    %498 = vmatprep.subr.mxu0 0.0
    %499 = vmatpush1.msra.mxu0 0.0
    %500 = vmatprep.subr.mxu0 0.0
    %501 = vmatpush1.msra.mxu0 0.0
    %502 = vmatprep.subr.mxu0 0.0
    %503 = vmatpush1.msra.mxu0 0.0
    %504 = vmatprep.subr.mxu0 0.0
    %505 = vmatpush1.msra.mxu0 0.0
    %506 = vmatprep.subr.mxu0 0.0
    %507 = vmatpush1.msra.mxu0 0.0
    %508 = vmatprep.subr.mxu0 0.0
    %509 = vmatpush1.msra.mxu0 0.0
    %510 = vmatprep.subr.mxu0 0.0
    %511 = vmatpush1.msra.mxu0 0.0
    %512 = vmatprep.subr.mxu0 0.0
    %513 = vmatpush1.msra.mxu0 0.0
    %514 = vmatprep.subr.mxu0 0.0
    %515 = vmatpush1.msra.mxu0 0.0
    %516 = vmatprep.subr.mxu0 0.0
    %517 = vmatpush1.msra.mxu0 0.0
    %518 = vmatprep.subr.mxu0 0.0
    %519 = vmatpush1.msra.mxu0 0.0
    %520 = vmatprep.subr.mxu0 0.0
    %521 = vmatpush1.msra.mxu0 0.0
    %522 = vmatprep.subr.mxu0 0.0
    %523 = vmatpush1.msra.mxu0 0.0
    %524 = vmatprep.subr.mxu0 0.0
    %525 = vmatpush1.msra.mxu0 0.0
    %526 = vmatprep.subr.mxu0 0.0
    %527 = vmatpush1.msra.mxu0 0.0
    %528 = vmatprep.subr.mxu0 0.0
    %529 = vmatpush1.msra.mxu0 0.0
    %530 = vmatprep.subr.mxu0 0.0
    %531 = vmatpush1.msra.mxu0 0.0
    %532 = vmatprep.subr.mxu0 0.0
    %533 = vmatpush1.msra.mxu0 0.0
    %534 = vmatprep.mubr.f32.mxu0 0.0
    %535 = vmatmul.mubr.f32.gmra.mrb[0].mxu0 %v255
    %v536 = vpop.f32.mrb[0].mxu0
    %v537 = vadd.f32 %v466, %v536
    %v538 = vpop.f32.mrb[0].mxu0
    %v539 = vadd.f32 %v468, %v538
    %540 = vdwg.mxu0
    %541 = vmatprep.subr.mxu0 0.0
    %542 = vmatpush1.msra.mxu0 %v32
    %543 = vmatprep.subr.mxu0 0.0
    %544 = vmatpush1.msra.mxu0 %v37
    %545 = vmatprep.subr.mxu0 0.0
    %546 = vmatpush1.msra.mxu0 %v42
    %547 = vmatprep.subr.mxu0 0.0
    %548 = vmatpush1.msra.mxu0 %v47
    %549 = vmatprep.subr.mxu0 0.0
    %550 = vmatpush1.msra.mxu0 %v52
    %551 = vmatprep.subr.mxu0 0.0
    %552 = vmatpush1.msra.mxu0 %v57
    %553 = vmatprep.subr.mxu0 0.0
    %554 = vmatpush1.msra.mxu0 %v62
    %555 = vmatprep.subr.mxu0 0.0
    %556 = vmatpush1.msra.mxu0 %v67
    %557 = vmatprep.subr.mxu0 0.0
    %558 = vmatpush1.msra.mxu0 %v72
    %559 = vmatprep.subr.mxu0 0.0
    %560 = vmatpush1.msra.mxu0 %v77
    %561 = vmatprep.subr.mxu0 0.0
    %562 = vmatpush1.msra.mxu0 %v82
    %563 = vmatprep.subr.mxu0 0.0
    %564 = vmatpush1.msra.mxu0 %v87
    %565 = vmatprep.subr.mxu0 0.0
    %566 = vmatpush1.msra.mxu0 %v92
    %567 = vmatprep.subr.mxu0 0.0
    %568 = vmatpush1.msra.mxu0 %v97
    %569 = vmatprep.subr.mxu0 0.0
    %570 = vmatpush1.msra.mxu0 %v102
    %571 = vmatprep.subr.mxu0 0.0
    %572 = vmatpush1.msra.mxu0 %v107
    %573 = vmatprep.subr.mxu0 0.0
    %574 = vmatpush1.msra.mxu0 %v112
    %575 = vmatprep.subr.mxu0 0.0
    %576 = vmatpush1.msra.mxu0 %v117
    %577 = vmatprep.subr.mxu0 0.0
    %578 = vmatpush1.msra.mxu0 %v122
    %579 = vmatprep.subr.mxu0 0.0
    %580 = vmatpush1.msra.mxu0 %v127
    %581 = vmatprep.subr.mxu0 0.0
    %582 = vmatpush1.msra.mxu0 %v132
    %583 = vmatprep.subr.mxu0 0.0
    %584 = vmatpush1.msra.mxu0 %v137
    %585 = vmatprep.subr.mxu0 0.0
    %586 = vmatpush1.msra.mxu0 %v142
    %587 = vmatprep.subr.mxu0 0.0
    %588 = vmatpush1.msra.mxu0 %v147
    %589 = vmatprep.subr.mxu0 0.0
    %590 = vmatpush1.msra.mxu0 %v152
    %591 = vmatprep.subr.mxu0 0.0
    %592 = vmatpush1.msra.mxu0 %v157
    %593 = vmatprep.subr.mxu0 0.0
    %594 = vmatpush1.msra.mxu0 %v162
    %595 = vmatprep.subr.mxu0 0.0
    %596 = vmatpush1.msra.mxu0 %v167
    %597 = vmatprep.subr.mxu0 0.0
    %598 = vmatpush1.msra.mxu0 %v172
    %599 = vmatprep.subr.mxu0 0.0
    %600 = vmatpush1.msra.mxu0 %v177
    %601 = vmatprep.subr.mxu0 0.0
    %602 = vmatpush1.msra.mxu0 %v182
    %603 = vmatprep.subr.mxu0 0.0
    %604 = vmatpush1.msra.mxu0 %v187
    %605 = vmatprep.mubr.f32.mxu0 %v251
    %606 = vmatmul.mubr.f32.gmra.mrb[0].mxu0 %v243
    %v607 = vpop.f32.mrb[0].mxu0
    %v608 = vadd.f32 %v229, %v607
    %v609 = vpop.f32.mrb[0].mxu0
    %610 = vdwg.mxu0
    %611 = vmatprep.subr.mxu0 0.0
    %612 = vmatpush1.msra.mxu0 %v192
    %613 = vmatprep.subr.mxu0 0.0
    %614 = vmatpush1.msra.mxu0 %v197
    %615 = vmatprep.subr.mxu0 0.0
    %616 = vmatpush1.msra.mxu0 %v202
    %617 = vmatprep.subr.mxu0 0.0
    %618 = vmatpush1.msra.mxu0 %v207
    %619 = vmatprep.subr.mxu0 0.0
    %620 = vmatpush1.msra.mxu0 0.0
    %621 = vmatprep.subr.mxu0 0.0
    %622 = vmatpush1.msra.mxu0 0.0
    %623 = vmatprep.subr.mxu0 0.0
    %624 = vmatpush1.msra.mxu0 0.0
    %625 = vmatprep.subr.mxu0 0.0
    %626 = vmatpush1.msra.mxu0 0.0
    %627 = vmatprep.subr.mxu0 0.0
    %628 = vmatpush1.msra.mxu0 0.0
    %629 = vmatprep.subr.mxu0 0.0
    %630 = vmatpush1.msra.mxu0 0.0
    %631 = vmatprep.subr.mxu0 0.0
    %632 = vmatpush1.msra.mxu0 0.0
    %633 = vmatprep.subr.mxu0 0.0
    %634 = vmatpush1.msra.mxu0 0.0
    %635 = vmatprep.subr.mxu0 0.0
    %636 = vmatpush1.msra.mxu0 0.0
    %637 = vmatprep.subr.mxu0 0.0
    %638 = vmatpush1.msra.mxu0 0.0
    %639 = vmatprep.subr.mxu0 0.0
    %640 = vmatpush1.msra.mxu0 0.0
    %641 = vmatprep.subr.mxu0 0.0
    %642 = vmatpush1.msra.mxu0 0.0
    %643 = vmatprep.subr.mxu0 0.0
    %644 = vmatpush1.msra.mxu0 0.0
    %645 = vmatprep.subr.mxu0 0.0
    %646 = vmatpush1.msra.mxu0 0.0
    %647 = vmatprep.subr.mxu0 0.0
    %648 = vmatpush1.msra.mxu0 0.0
    %649 = vmatprep.subr.mxu0 0.0
    %650 = vmatpush1.msra.mxu0 0.0
    %651 = vmatprep.subr.mxu0 0.0
    %652 = vmatpush1.msra.mxu0 0.0
    %653 = vmatprep.subr.mxu0 0.0
    %654 = vmatpush1.msra.mxu0 0.0
    %655 = vmatprep.subr.mxu0 0.0
    %656 = vmatpush1.msra.mxu0 0.0
    %657 = vmatprep.subr.mxu0 0.0
    %658 = vmatpush1.msra.mxu0 0.0
    %659 = vmatprep.subr.mxu0 0.0
    %660 = vmatpush1.msra.mxu0 0.0
    %661 = vmatprep.subr.mxu0 0.0
    %662 = vmatpush1.msra.mxu0 0.0
    %663 = vmatprep.subr.mxu0 0.0
    %664 = vmatpush1.msra.mxu0 0.0
    %665 = vmatprep.subr.mxu0 0.0
    %666 = vmatpush1.msra.mxu0 0.0
    %667 = vmatprep.subr.mxu0 0.0
    %668 = vmatpush1.msra.mxu0 0.0
    %669 = vmatprep.subr.mxu0 0.0
    %670 = vmatpush1.msra.mxu0 0.0
    %671 = vmatprep.subr.mxu0 0.0
    %672 = vmatpush1.msra.mxu0 0.0
    %673 = vmatprep.subr.mxu0 0.0
    %674 = vmatpush1.msra.mxu0 0.0
    %675 = vmatprep.mubr.f32.mxu0 0.0
    %676 = vmatmul.mubr.f32.gmra.mrb[0].mxu0 %v255
    %v677 = vpop.f32.mrb[0].mxu0
    %v678 = vadd.f32 %v608, %v677
    %v679 = vpop.f32.mrb[0].mxu0
    %680 = vdwg.mxu0
    %vm681 = vcmp.gt.f32.partialorder %v395, 0.0
    %vm682 = vcmp.gt.f32.partialorder %v397, 0.0
    %vm683 = vcmp.gt.f32.partialorder %v537, 0.0
    %vm684 = vcmp.gt.f32.partialorder %v539, 0.0
    %vm685 = vcmp.gt.f32.partialorder %v678, 0.0
    %v686 = vmin.f32 %v395, 0.0
    %v687 = vmin.f32 %v397, 0.0
    %v688 = vmin.f32 %v537, 0.0
    %v689 = vmin.f32 %v539, 0.0
    %v690 = vmin.f32 %v678, 0.0
    %v691 = vmul.f32 %v686, 1.442695
    %v692 = vpow.pop %v691
    %v693 = vmul.f32 %v687, 1.442695
    %v694 = vpow.pop %v693
    %v695 = vmul.f32 %v688, 1.442695
    %v696 = vpow.pop %v695
    %v697 = vmul.f32 %v689, 1.442695
    %v698 = vpow.pop %v697
    %v699 = vmul.f32 %v690, 1.442695
    %v700 = vpow.pop %v699
    %v701 = vsub.f32 %v692, 1.0
    %v702 = vsub.f32 %v694, 1.0
    %v703 = vsub.f32 %v696, 1.0
    %v704 = vsub.f32 %v698, 1.0
    %v705 = vsub.f32 %v700, 1.0
    %v706 = vsel %vm681, %v395, %v701
    %v707 = vsel %vm682, %v397, %v702
    %v708 = vsel %vm683, %v537, %v703
    %v709 = vsel %vm684, %v539, %v704
    %v710 = vsel %vm685, %v678, %v705
    %v711 = vld [vmem:[%s3] sm:$0xff]
    %v712 = vld [vmem:[%s3 + $0x8] sm:$0xff]
    %v713 = vld [vmem:[%s3 + $0x10] sm:$0xff]
    %v714 = vld [vmem:[%s3 + $0x18] sm:$0xff]
    %v715 = vld [vmem:[%s3 + $0x20] sm:$0xff]
    %v716 = vld [vmem:[%s3 + $0x28] sm:$0xff]
    %v717 = vld [vmem:[%s3 + $0x30] sm:$0xff]
    %v718 = vld [vmem:[%s3 + $0x38] sm:$0xff]
    %v719 = vld [vmem:[%s3 + $0x40] sm:$0xff]
    %v720 = vld [vmem:[%s3 + $0x48] sm:$0xff]
    %v721 = vld [vmem:[%s3 + $0x50] sm:$0xff]
    %v722 = vld [vmem:[%s3 + $0x58] sm:$0xff]
    %v723 = vld [vmem:[%s3 + $0x60] sm:$0xff]
    %v724 = vld [vmem:[%s3 + $0x68] sm:$0xff]
    %v725 = vld [vmem:[%s3 + $0x70] sm:$0xff]
    %v726 = vld [vmem:[%s3 + $0x78] sm:$0xff]
    %v727 = vld [vmem:[%s3 + $0x80] sm:$0xff]
    %v728 = vld [vmem:[%s3 + $0x88] sm:$0xff]
    %v729 = vld [vmem:[%s3 + $0x90] sm:$0xff]
    %v730 = vld [vmem:[%s3 + $0x98] sm:$0xff]
    %v731 = vld [vmem:[%s3 + $0xa0] sm:$0xff]
    %v732 = vld [vmem:[%s3 + $0xa8] sm:$0xff]
    %v733 = vld [vmem:[%s3 + $0xb0] sm:$0xff]
    %v734 = vld [vmem:[%s3 + $0xb8] sm:$0xff]
    %v735 = vld [vmem:[%s3 + $0xc0] sm:$0xff]
    %v736 = vld [vmem:[%s3 + $0xc8] sm:$0xff]
    %v737 = vld [vmem:[%s3 + $0xd0] sm:$0xff]
    %v738 = vld [vmem:[%s3 + $0xd8] sm:$0xff]
    %v739 = vld [vmem:[%s3 + $0xe0] sm:$0xff]
    %v740 = vld [vmem:[%s3 + $0xe8] sm:$0xff]
    %v741 = vld [vmem:[%s3 + $0xf0] sm:$0xff]
    %v742 = vld [vmem:[%s3 + $0xf8] sm:$0xff]
    %v743 = vld [vmem:[%s3 + $0x100] sm:$0xff]
    %v744 = vld [vmem:[%s3 + $0x108] sm:$0xff]
    %v745 = vld [vmem:[%s3 + $0x110] sm:$0xff]
    %v746 = vld [vmem:[%s3 + $0x118] sm:$0xff]
    %v747 = vld [vmem:[%s3 + $0x120] sm:$0xff]
    %v748 = vld [vmem:[%s3 + $0x128] sm:$0xff]
    %v749 = vld [vmem:[%s3 + $0x130] sm:$0xff]
    %v750 = vld [vmem:[%s3 + $0x138] sm:$0xff]
    %v751 = vld [vmem:[%s3 + $0x140] sm:$0xff]
    %v752 = vld [vmem:[%s3 + $0x148] sm:$0xff]
    %v753 = vld [vmem:[%s3 + $0x150] sm:$0xff]
    %v754 = vld [vmem:[%s3 + $0x158] sm:$0xff]
    %v755 = vld [vmem:[%s3 + $0x160] sm:$0xff]
    %v756 = vld [vmem:[%s3 + $0x168] sm:$0xff]
    %v757 = vld [vmem:[%s3 + $0x170] sm:$0xff]
    %v758 = vld [vmem:[%s3 + $0x178] sm:$0xff]
    %v759 = vld [vmem:[%s3 + $0x180] sm:$0xff]
    %v760 = vld [vmem:[%s3 + $0x188] sm:$0xff]
    %v761 = vld [vmem:[%s3 + $0x190] sm:$0xff]
    %v762 = vld [vmem:[%s3 + $0x198] sm:$0xff]
    %v763 = vld [vmem:[%s3 + $0x1a0] sm:$0xff]
    %v764 = vld [vmem:[%s3 + $0x1a8] sm:$0xff]
    %v765 = vld [vmem:[%s3 + $0x1b0] sm:$0xff]
    %v766 = vld [vmem:[%s3 + $0x1b8] sm:$0xff]
    %v767 = vld [vmem:[%s3 + $0x1c0] sm:$0xff]
    %v768 = vld [vmem:[%s3 + $0x1c8] sm:$0xff]
    %v769 = vld [vmem:[%s3 + $0x1d0] sm:$0xff]
    %v770 = vld [vmem:[%s3 + $0x1d8] sm:$0xff]
    %v771 = vld [vmem:[%s3 + $0x1e0] sm:$0xff]
    %v772 = vld [vmem:[%s3 + $0x1e8] sm:$0xff]
    %v773 = vld [vmem:[%s3 + $0x1f0] sm:$0xff]
    %v774 = vld [vmem:[%s3 + $0x1f8] sm:$0xff]
    %v775 = vld [vmem:[%s3 + $0x200] sm:$0xff]
    %v776 = vld [vmem:[%s3 + $0x208] sm:$0xff]
    %v777 = vld [vmem:[%s3 + $0x210] sm:$0xff]
    %v778 = vld [vmem:[%s3 + $0x218] sm:$0xff]
    %v779 = vld [vmem:[%s3 + $0x220] sm:$0xff]
    %v780 = vld [vmem:[%s3 + $0x228] sm:$0xff]
    %v781 = vld [vmem:[%s3 + $0x230] sm:$0xff]
    %v782 = vld [vmem:[%s3 + $0x238] sm:$0xff]
    %v783 = vld [vmem:[%s3 + $0x240] sm:$0xff]
    %v784 = vld [vmem:[%s3 + $0x248] sm:$0xff]
    %v785 = vld [vmem:[%s3 + $0x250] sm:$0xff]
    %v786 = vld [vmem:[%s3 + $0x258] sm:$0xff]
    %v787 = vld [vmem:[%s3 + $0x260] sm:$0xff]
    %v788 = vld [vmem:[%s3 + $0x268] sm:$0xff]
    %v789 = vld [vmem:[%s3 + $0x270] sm:$0xff]
    %v790 = vld [vmem:[%s3 + $0x278] sm:$0xff]
    %v791 = vld [vmem:[%s3 + $0x280] sm:$0xff]
    %v792 = vld [vmem:[%s3 + $0x288] sm:$0xff]
    %v793 = vld [vmem:[%s3 + $0x290] sm:$0xff]
    %v794 = vld [vmem:[%s3 + $0x298] sm:$0xff]
    %v795 = vld [vmem:[%s3 + $0x2a0] sm:$0xff]
    %v796 = vld [vmem:[%s3 + $0x2a8] sm:$0xff]
    %v797 = vld [vmem:[%s3 + $0x2b0] sm:$0xff]
    %v798 = vld [vmem:[%s3 + $0x2b8] sm:$0xff]
    %v799 = vld [vmem:[%s3 + $0x2c0] sm:$0xff]
    %v800 = vld [vmem:[%s3 + $0x2c8] sm:$0xff]
    %v801 = vld [vmem:[%s3 + $0x2d0] sm:$0xff]
    %v802 = vld [vmem:[%s3 + $0x2d8] sm:$0xff]
    %v803 = vld [vmem:[%s3 + $0x2e0] sm:$0xff]
    %v804 = vld [vmem:[%s3 + $0x2e8] sm:$0xff]
    %v805 = vld [vmem:[%s3 + $0x2f0] sm:$0xff]
    %v806 = vld [vmem:[%s3 + $0x2f8] sm:$0xff]
    %v807 = vld [vmem:[%s3 + $0x300] sm:$0xff]
    %v808 = vld [vmem:[%s3 + $0x308] sm:$0xff]
    %v809 = vld [vmem:[%s3 + $0x310] sm:$0xff]
    %v810 = vld [vmem:[%s3 + $0x318] sm:$0xff]
    %v811 = vld [vmem:[%s3 + $0x320] sm:$0xff]
    %v812 = vld [vmem:[%s3 + $0x328] sm:$0xff]
    %v813 = vld [vmem:[%s3 + $0x330] sm:$0xff]
    %v814 = vld [vmem:[%s3 + $0x338] sm:$0xff]
    %v815 = vld [vmem:[%s3 + $0x340] sm:$0xff]
    %v816 = vld [vmem:[%s3 + $0x348] sm:$0xff]
    %v817 = vld [vmem:[%s3 + $0x350] sm:$0xff]
    %v818 = vld [vmem:[%s3 + $0x358] sm:$0xff]
    %v819 = vld [vmem:[%s3 + $0x360] sm:$0xff]
    %v820 = vld [vmem:[%s3 + $0x368] sm:$0xff]
    %v821 = vld [vmem:[%s3 + $0x370] sm:$0xff]
    %v822 = vld [vmem:[%s3 + $0x378] sm:$0xff]
    %v823 = vld [vmem:[%s3 + $0x380] sm:$0xff]
    %v824 = vld [vmem:[%s3 + $0x388] sm:$0xff]
    %v825 = vld [vmem:[%s3 + $0x390] sm:$0xff]
    %v826 = vld [vmem:[%s3 + $0x398] sm:$0xff]
    %v827 = vld [vmem:[%s3 + $0x3a0] sm:$0xff]
    %v828 = vld [vmem:[%s3 + $0x3a8] sm:$0xff]
    %v829 = vld [vmem:[%s3 + $0x3b0] sm:$0xff]
    %v830 = vld [vmem:[%s3 + $0x3b8] sm:$0xff]
    %v831 = vld [vmem:[%s3 + $0x3c0] sm:$0xff]
    %v832 = vld [vmem:[%s3 + $0x3c8] sm:$0xff]
    %v833 = vld [vmem:[%s3 + $0x3d0] sm:$0xff]
    %v834 = vld [vmem:[%s3 + $0x3d8] sm:$0xff]
    %v835 = vld [vmem:[%s3 + $0x3e0] sm:$0xff]
    %v836 = vld [vmem:[%s3 + $0x3e8] sm:$0xff]
    %v837 = vld [vmem:[%s3 + $0x3f0] sm:$0xff]
    %v838 = vld [vmem:[%s3 + $0x3f8] sm:$0xff]
    %v839 = vld [vmem:[%s3 + $0x400] sm:$0xff]
    %v840 = vld [vmem:[%s3 + $0x408] sm:$0xff]
    %v841 = vld [vmem:[%s4] sm:$0x3]
    %v843 = vlaneseq
    %v844 = vshrl.u32 %v843, 7
    %v845 = vsub.s32 0, %v844
    %v846 = vrot.slane %v841, %v845
    %v847 = vlaneseq
    %v848 = vshrl.u32 %v847, 7
    %v849 = vsub.s32 1, %v848
    %v850 = vrot.slane %v841, %v849
    %vm853 = vcmask 64512
    %v855 = vsel %vm853, %v710, 0
    %857 = vmatprep.subr.mxu0 %v712
    %858 = vmatpush1.msra.mxu0 %v711
    %859 = vmatprep.subr.mxu0 %v714
    %860 = vmatpush1.msra.mxu0 %v713
    %861 = vmatprep.subr.mxu0 %v716
    %862 = vmatpush1.msra.mxu0 %v715
    %863 = vmatprep.subr.mxu0 %v718
    %864 = vmatpush1.msra.mxu0 %v717
    %865 = vmatprep.subr.mxu0 %v720
    %866 = vmatpush1.msra.mxu0 %v719
    %867 = vmatprep.subr.mxu0 %v722
    %868 = vmatpush1.msra.mxu0 %v721
    %869 = vmatprep.subr.mxu0 %v724
    %870 = vmatpush1.msra.mxu0 %v723
    %871 = vmatprep.subr.mxu0 %v726
    %872 = vmatpush1.msra.mxu0 %v725
    %873 = vmatprep.subr.mxu0 %v728
    %874 = vmatpush1.msra.mxu0 %v727
    %875 = vmatprep.subr.mxu0 %v730
    %876 = vmatpush1.msra.mxu0 %v729
    %877 = vmatprep.subr.mxu0 %v732
    %878 = vmatpush1.msra.mxu0 %v731
    %879 = vmatprep.subr.mxu0 %v734
    %880 = vmatpush1.msra.mxu0 %v733
    %881 = vmatprep.subr.mxu0 %v736
    %882 = vmatpush1.msra.mxu0 %v735
    %883 = vmatprep.subr.mxu0 %v738
    %884 = vmatpush1.msra.mxu0 %v737
    %885 = vmatprep.subr.mxu0 %v740
    %886 = vmatpush1.msra.mxu0 %v739
    %887 = vmatprep.subr.mxu0 %v742
    %888 = vmatpush1.msra.mxu0 %v741
    %889 = vmatprep.subr.mxu0 %v744
    %890 = vmatpush1.msra.mxu0 %v743
    %891 = vmatprep.subr.mxu0 %v746
    %892 = vmatpush1.msra.mxu0 %v745
    %893 = vmatprep.subr.mxu0 %v748
    %894 = vmatpush1.msra.mxu0 %v747
    %895 = vmatprep.subr.mxu0 %v750
    %896 = vmatpush1.msra.mxu0 %v749
    %897 = vmatprep.subr.mxu0 %v752
    %898 = vmatpush1.msra.mxu0 %v751
    %899 = vmatprep.subr.mxu0 %v754
    %900 = vmatpush1.msra.mxu0 %v753
    %901 = vmatprep.subr.mxu0 %v756
    %902 = vmatpush1.msra.mxu0 %v755
    %903 = vmatprep.subr.mxu0 %v758
    %904 = vmatpush1.msra.mxu0 %v757
    %905 = vmatprep.subr.mxu0 %v760
    %906 = vmatpush1.msra.mxu0 %v759
    %907 = vmatprep.subr.mxu0 %v762
    %908 = vmatpush1.msra.mxu0 %v761
    %909 = vmatprep.subr.mxu0 %v764
    %910 = vmatpush1.msra.mxu0 %v763
    %911 = vmatprep.subr.mxu0 %v766
    %912 = vmatpush1.msra.mxu0 %v765
    %913 = vmatprep.subr.mxu0 %v768
    %914 = vmatpush1.msra.mxu0 %v767
    %915 = vmatprep.subr.mxu0 %v770
    %916 = vmatpush1.msra.mxu0 %v769
    %917 = vmatprep.subr.mxu0 %v772
    %918 = vmatpush1.msra.mxu0 %v771
    %919 = vmatprep.subr.mxu0 %v774
    %920 = vmatpush1.msra.mxu0 %v773
    %921 = vmatprep.mubr.f32.mxu0 %v707
    %922 = vmatmul.mubr.f32.gmra.mrb[0].mxu0 %v706
    %v923 = vpop.f32.mrb[0].mxu0
    %v924 = vadd.f32 %v846, %v923
    %v925 = vpop.f32.mrb[0].mxu0
    %v926 = vadd.f32 %v850, %v925
    %927 = vdwg.mxu0
    %928 = vmatprep.subr.mxu0 %v776
    %929 = vmatpush1.msra.mxu0 %v775
    %930 = vmatprep.subr.mxu0 %v778
    %931 = vmatpush1.msra.mxu0 %v777
    %932 = vmatprep.subr.mxu0 %v780
    %933 = vmatpush1.msra.mxu0 %v779
    %934 = vmatprep.subr.mxu0 %v782
    %935 = vmatpush1.msra.mxu0 %v781
    %936 = vmatprep.subr.mxu0 %v784
    %937 = vmatpush1.msra.mxu0 %v783
    %938 = vmatprep.subr.mxu0 %v786
    %939 = vmatpush1.msra.mxu0 %v785
    %940 = vmatprep.subr.mxu0 %v788
    %941 = vmatpush1.msra.mxu0 %v787
    %942 = vmatprep.subr.mxu0 %v790
    %943 = vmatpush1.msra.mxu0 %v789
    %944 = vmatprep.subr.mxu0 %v792
    %945 = vmatpush1.msra.mxu0 %v791
    %946 = vmatprep.subr.mxu0 %v794
    %947 = vmatpush1.msra.mxu0 %v793
    %948 = vmatprep.subr.mxu0 %v796
    %949 = vmatpush1.msra.mxu0 %v795
    %950 = vmatprep.subr.mxu0 %v798
    %951 = vmatpush1.msra.mxu0 %v797
    %952 = vmatprep.subr.mxu0 %v800
    %953 = vmatpush1.msra.mxu0 %v799
    %954 = vmatprep.subr.mxu0 %v802
    %955 = vmatpush1.msra.mxu0 %v801
    %956 = vmatprep.subr.mxu0 %v804
    %957 = vmatpush1.msra.mxu0 %v803
    %958 = vmatprep.subr.mxu0 %v806
    %959 = vmatpush1.msra.mxu0 %v805
    %960 = vmatprep.subr.mxu0 %v808
    %961 = vmatpush1.msra.mxu0 %v807
    %962 = vmatprep.subr.mxu0 %v810
    %963 = vmatpush1.msra.mxu0 %v809
    %964 = vmatprep.subr.mxu0 %v812
    %965 = vmatpush1.msra.mxu0 %v811
    %966 = vmatprep.subr.mxu0 %v814
    %967 = vmatpush1.msra.mxu0 %v813
    %968 = vmatprep.subr.mxu0 %v816
    %969 = vmatpush1.msra.mxu0 %v815
    %970 = vmatprep.subr.mxu0 %v818
    %971 = vmatpush1.msra.mxu0 %v817
    %972 = vmatprep.subr.mxu0 %v820
    %973 = vmatpush1.msra.mxu0 %v819
    %974 = vmatprep.subr.mxu0 %v822
    %975 = vmatpush1.msra.mxu0 %v821
    %976 = vmatprep.subr.mxu0 %v824
    %977 = vmatpush1.msra.mxu0 %v823
    %978 = vmatprep.subr.mxu0 %v826
    %979 = vmatpush1.msra.mxu0 %v825
    %980 = vmatprep.subr.mxu0 %v828
    %981 = vmatpush1.msra.mxu0 %v827
    %982 = vmatprep.subr.mxu0 %v830
    %983 = vmatpush1.msra.mxu0 %v829
    %984 = vmatprep.subr.mxu0 %v832
    %985 = vmatpush1.msra.mxu0 %v831
    %986 = vmatprep.subr.mxu0 %v834
    %987 = vmatpush1.msra.mxu0 %v833
    %988 = vmatprep.subr.mxu0 %v836
    %989 = vmatpush1.msra.mxu0 %v835
    %990 = vmatprep.subr.mxu0 %v838
    %991 = vmatpush1.msra.mxu0 %v837
    %992 = vmatprep.mubr.f32.mxu0 %v709
    %993 = vmatmul.mubr.f32.gmra.mrb[0].mxu0 %v708
    %v994 = vpop.f32.mrb[0].mxu0
    %v995 = vadd.f32 %v924, %v994
    %v996 = vpop.f32.mrb[0].mxu0
    %v997 = vadd.f32 %v926, %v996
    %998 = vdwg.mxu0
    %999 = vmatprep.subr.mxu0 %v840
    %1000 = vmatpush1.msra.mxu0 %v839
    %1001 = vmatprep.subr.mxu0 0.0
    %1002 = vmatpush1.msra.mxu0 0.0
    %1003 = vmatprep.subr.mxu0 0.0
    %1004 = vmatpush1.msra.mxu0 0.0
    %1005 = vmatprep.subr.mxu0 0.0
    %1006 = vmatpush1.msra.mxu0 0.0
    %1007 = vmatprep.subr.mxu0 0.0
    %1008 = vmatpush1.msra.mxu0 0.0
    %1009 = vmatprep.subr.mxu0 0.0
    %1010 = vmatpush1.msra.mxu0 0.0
    %1011 = vmatprep.subr.mxu0 0.0
    %1012 = vmatpush1.msra.mxu0 0.0
    %1013 = vmatprep.subr.mxu0 0.0
    %1014 = vmatpush1.msra.mxu0 0.0
    %1015 = vmatprep.subr.mxu0 0.0
    %1016 = vmatpush1.msra.mxu0 0.0
    %1017 = vmatprep.subr.mxu0 0.0
    %1018 = vmatpush1.msra.mxu0 0.0
    %1019 = vmatprep.subr.mxu0 0.0
    %1020 = vmatpush1.msra.mxu0 0.0
    %1021 = vmatprep.subr.mxu0 0.0
    %1022 = vmatpush1.msra.mxu0 0.0
    %1023 = vmatprep.subr.mxu0 0.0
    %1024 = vmatpush1.msra.mxu0 0.0
    %1025 = vmatprep.subr.mxu0 0.0
    %1026 = vmatpush1.msra.mxu0 0.0
    %1027 = vmatprep.subr.mxu0 0.0
    %1028 = vmatpush1.msra.mxu0 0.0
    %1029 = vmatprep.subr.mxu0 0.0
    %1030 = vmatpush1.msra.mxu0 0.0
    %1031 = vmatprep.subr.mxu0 0.0
    %1032 = vmatpush1.msra.mxu0 0.0
    %1033 = vmatprep.subr.mxu0 0.0
    %1034 = vmatpush1.msra.mxu0 0.0
    %1035 = vmatprep.subr.mxu0 0.0
    %1036 = vmatpush1.msra.mxu0 0.0
    %1037 = vmatprep.subr.mxu0 0.0
    %1038 = vmatpush1.msra.mxu0 0.0
    %1039 = vmatprep.subr.mxu0 0.0
    %1040 = vmatpush1.msra.mxu0 0.0
    %1041 = vmatprep.subr.mxu0 0.0
    %1042 = vmatpush1.msra.mxu0 0.0
    %1043 = vmatprep.subr.mxu0 0.0
    %1044 = vmatpush1.msra.mxu0 0.0
    %1045 = vmatprep.subr.mxu0 0.0
    %1046 = vmatpush1.msra.mxu0 0.0
    %1047 = vmatprep.subr.mxu0 0.0
    %1048 = vmatpush1.msra.mxu0 0.0
    %1049 = vmatprep.subr.mxu0 0.0
    %1050 = vmatpush1.msra.mxu0 0.0
    %1051 = vmatprep.subr.mxu0 0.0
    %1052 = vmatpush1.msra.mxu0 0.0
    %1053 = vmatprep.subr.mxu0 0.0
    %1054 = vmatpush1.msra.mxu0 0.0
    %1055 = vmatprep.subr.mxu0 0.0
    %1056 = vmatpush1.msra.mxu0 0.0
    %1057 = vmatprep.subr.mxu0 0.0
    %1058 = vmatpush1.msra.mxu0 0.0
    %1059 = vmatprep.subr.mxu0 0.0
    %1060 = vmatpush1.msra.mxu0 0.0
    %1061 = vmatprep.subr.mxu0 0.0
    %1062 = vmatpush1.msra.mxu0 0.0
    %1063 = vmatprep.mubr.f32.mxu0 0.0
    %1064 = vmatmul.mubr.f32.gmra.mrb[0].mxu0 %v855
    %v1065 = vpop.f32.mrb[0].mxu0
    %v1066 = vadd.f32 %v995, %v1065
    %v1067 = vpop.f32.mrb[0].mxu0
    %v1068 = vadd.f32 %v997, %v1067
    %1069 = vdwg.mxu0
    %vm1070 = vcmp.gt.f32.partialorder %v1066, 0.0
    %vm1071 = vcmp.gt.f32.partialorder %v1068, 0.0
    %v1072 = vmin.f32 %v1066, 0.0
    %v1073 = vmin.f32 %v1068, 0.0
    %v1074 = vmul.f32 %v1072, 1.442695
    %v1075 = vpow.pop %v1074
    %v1076 = vmul.f32 %v1073, 1.442695
    %v1077 = vpow.pop %v1076
    %v1078 = vsub.f32 %v1075, 1.0
    %v1079 = vsub.f32 %v1077, 1.0
    %v1080 = vsel %vm1070, %v1066, %v1078
    %v1081 = vsel %vm1071, %v1068, %v1079
    %v1082 = vld [vmem:[%s5] sm:$0xff]
    %v1083 = vld [vmem:[%s5 + $0x8] sm:$0xff]
    %v1084 = vld [vmem:[%s5 + $0x10] sm:$0xff]
    %v1085 = vld [vmem:[%s5 + $0x18] sm:$0xff]
    %v1086 = vld [vmem:[%s5 + $0x20] sm:$0xff]
    %v1087 = vld [vmem:[%s5 + $0x28] sm:$0xff]
    %v1088 = vld [vmem:[%s5 + $0x30] sm:$0xff]
    %v1089 = vld [vmem:[%s5 + $0x38] sm:$0xff]
    %v1090 = vld [vmem:[%s5 + $0x40] sm:$0xff]
    %v1091 = vld [vmem:[%s5 + $0x48] sm:$0xff]
    %v1092 = vld [vmem:[%s5 + $0x50] sm:$0xff]
    %v1093 = vld [vmem:[%s5 + $0x58] sm:$0xff]
    %v1094 = vld [vmem:[%s5 + $0x60] sm:$0xff]
    %v1095 = vld [vmem:[%s5 + $0x68] sm:$0xff]
    %v1096 = vld [vmem:[%s5 + $0x70] sm:$0xff]
    %v1097 = vld [vmem:[%s5 + $0x78] sm:$0xff]
    %v1098 = vld [vmem:[%s5 + $0x80] sm:$0xff]
    %v1099 = vld [vmem:[%s6] sm:$0x1]
    %v1101 = vlaneseq
    %v1102 = vshrl.u32 %v1101, 7
    %v1103 = vsub.s32 0, %v1102
    %v1104 = vrot.slane %v1099, %v1103
    %v1107 = vsel %vm853, %v1081, 0
    %1109 = vmatprep.subr.mxu0 0.0
    %1110 = vmatpush1.msra.mxu0 %v1082
    %1111 = vmatprep.subr.mxu0 0.0
    %1112 = vmatpush1.msra.mxu0 %v1083
    %1113 = vmatprep.subr.mxu0 0.0
    %1114 = vmatpush1.msra.mxu0 %v1084
    %1115 = vmatprep.subr.mxu0 0.0
    %1116 = vmatpush1.msra.mxu0 %v1085
    %1117 = vmatprep.subr.mxu0 0.0
    %1118 = vmatpush1.msra.mxu0 %v1086
    %1119 = vmatprep.subr.mxu0 0.0
    %1120 = vmatpush1.msra.mxu0 %v1087
    %1121 = vmatprep.subr.mxu0 0.0
    %1122 = vmatpush1.msra.mxu0 %v1088
    %1123 = vmatprep.subr.mxu0 0.0
    %1124 = vmatpush1.msra.mxu0 %v1089
    %1125 = vmatprep.subr.mxu0 0.0
    %1126 = vmatpush1.msra.mxu0 %v1090
    %1127 = vmatprep.subr.mxu0 0.0
    %1128 = vmatpush1.msra.mxu0 %v1091
    %1129 = vmatprep.subr.mxu0 0.0
    %1130 = vmatpush1.msra.mxu0 %v1092
    %1131 = vmatprep.subr.mxu0 0.0
    %1132 = vmatpush1.msra.mxu0 %v1093
    %1133 = vmatprep.subr.mxu0 0.0
    %1134 = vmatpush1.msra.mxu0 %v1094
    %1135 = vmatprep.subr.mxu0 0.0
    %1136 = vmatpush1.msra.mxu0 %v1095
    %1137 = vmatprep.subr.mxu0 0.0
    %1138 = vmatpush1.msra.mxu0 %v1096
    %1139 = vmatprep.subr.mxu0 0.0
    %1140 = vmatpush1.msra.mxu0 %v1097
    %1141 = vmatprep.subr.mxu0 0.0
    %1142 = vmatpush1.msra.mxu0 %v1098
    %1143 = vmatprep.subr.mxu0 0.0
    %1144 = vmatpush1.msra.mxu0 0.0
    %1145 = vmatprep.subr.mxu0 0.0
    %1146 = vmatpush1.msra.mxu0 0.0
    %1147 = vmatprep.subr.mxu0 0.0
    %1148 = vmatpush1.msra.mxu0 0.0
    %1149 = vmatprep.subr.mxu0 0.0
    %1150 = vmatpush1.msra.mxu0 0.0
    %1151 = vmatprep.subr.mxu0 0.0
    %1152 = vmatpush1.msra.mxu0 0.0
    %1153 = vmatprep.subr.mxu0 0.0
    %1154 = vmatpush1.msra.mxu0 0.0
    %1155 = vmatprep.subr.mxu0 0.0
    %1156 = vmatpush1.msra.mxu0 0.0
    %1157 = vmatprep.subr.mxu0 0.0
    %1158 = vmatpush1.msra.mxu0 0.0
    %1159 = vmatprep.subr.mxu0 0.0
    %1160 = vmatpush1.msra.mxu0 0.0
    %1161 = vmatprep.subr.mxu0 0.0
    %1162 = vmatpush1.msra.mxu0 0.0
    %1163 = vmatprep.subr.mxu0 0.0
    %1164 = vmatpush1.msra.mxu0 0.0
    %1165 = vmatprep.subr.mxu0 0.0
    %1166 = vmatpush1.msra.mxu0 0.0
    %1167 = vmatprep.subr.mxu0 0.0
    %1168 = vmatpush1.msra.mxu0 0.0
    %1169 = vmatprep.subr.mxu0 0.0
    %1170 = vmatpush1.msra.mxu0 0.0
    %1171 = vmatprep.subr.mxu0 0.0
    %1172 = vmatpush1.msra.mxu0 0.0
    %1173 = vmatprep.mubr.f32.mxu0 %v1107
    %1174 = vmatmul.mubr.f32.gmra.mrb[0].mxu0 %v1080
    %v1175 = vpop.f32.mrb[0].mxu0
    %v1176 = vadd.f32 %v1104, %v1175
    %v1177 = vpop.f32.mrb[0].mxu0
    %1178 = vdwg.mxu0
    %vm1179 = vcmask 9216
    %1180 = vst.msk [vmem:[#allocation2] sm:$0x3] %vm1179, %v1176
    // Predicated region
    $region30: #{tpu_custom_call.1} parent=1 // pred_check
      _
    $region31: #{tpu_custom_call.1} parent=1 // pred_check_branch
      %1182 = sbr.rel (0) target = $region33
    $region32: #{tpu_custom_call.1} parent=1 // pred_region
      %s1184 = ssub.s32 32, 32
      %1185 = vsyncadd [#allocation3], %s1184
      %s1187 = sshll.u32 [#allocation2], 4
      %s1188 = int_to_ptr.vmem [resolvable:$true] %s1187
      %1190 = dma.vmem_to_hbm [thread:$0]  %s1188, 32, %s7, [#allocation3]
    $region33: #{tpu_custom_call.1} parent=1 // pred_fallthru
      _
    // Predicated region
    $region34: #{tpu_custom_call.1} parent=1 // pred_check
      _
    $region35: #{tpu_custom_call.1} parent=1 // pred_check_branch
      %1192 = sbr.rel (0) target = $region37
    $region36: #{tpu_custom_call.1} parent=1 // pred_region
      %1193 = dma.done [#allocation3], 32
    $region37: #{tpu_custom_call.1} parent=1 // pred_fallthru
      _
    %1194 = vsyncpa [#allocation3], 1

</llo_original>
